<compile_context>
chip_gen: v5e
topology: v5e:2x2
jax: 0.10.0
libtpu: 0.0.40
codegen_flags: <defaults>
</compile_context>

<pallas_src>
import jax
import jax.numpy as jnp
from jax import lax
from jax.experimental import pallas as pl
from jax.experimental.pallas import tpu as pltpu

_LANES = 128
_SUBLANES = 8
_MAX_TM = 2048   # rows per tile: 2048*128*4B = 1 MiB per f32 block
_NCORES = 2      # split the reduction across TensorCores (helps v7x)


def _round_up(x, m):
    return ((x + m - 1) // m) * m


def _make_kernel(tm, steps, valid_rows, needs_mask):
    def kernel(y_ref, yhat_ref, out_ref):
        i = pl.program_id(1)

        # Per-core accumulator lives in the (resident) output block.
        @pl.when(i == 0)
        def _():
            out_ref[...] = jnp.zeros_like(out_ref)

        y = y_ref[...].astype(jnp.float32)     # (tm, 128)
        yh = yhat_ref[...].astype(jnp.float32)
        d = jnp.abs(y - yh)
        s = jnp.abs(y)

        if needs_mask:
            # Mask rows past the real data (partial last block / overflow
            # grid steps whose index_map was clamped).
            c = pl.program_id(0)
            tile = c * steps + i
            row0 = tile * tm
            rows_idx = lax.broadcasted_iota(jnp.int32, (tm, _LANES), 0) + row0
            m = rows_idx < valid_rows
            d = jnp.where(m, d, 0.0)
            s = jnp.where(m, s, 0.0)

        # Reduce (tm,128) -> (8,128) as pure vreg-wise VPU adds (the reshape
        # groups whole (8,128) tiles, so no cross-lane/sublane movement).
        d3 = d.reshape(tm // _SUBLANES, _SUBLANES, _LANES)
        s3 = s.reshape(tm // _SUBLANES, _SUBLANES, _LANES)
        out_ref[0] += jnp.sum(d3, axis=0)   # partial sum of |y - y_hat|
        out_ref[1] += jnp.sum(s3, axis=0)   # partial sum of |y|

    return kernel


def wmape_loss(y, y_hat):
    assert y.shape == y_hat.shape
    n = y.size

    # Flatten without changing dtype (reshape of a contiguous array is free).
    y_flat = jnp.reshape(y, (-1,))
    yh_flat = jnp.reshape(y_hat, (-1,))

    pad = (-n) % _LANES
    if pad:
        # Only when the element count is not a multiple of 128. Zero padding
        # is neutral for both |y - y_hat| and |y|.
        y_flat = jnp.pad(y_flat, (0, pad))
        yh_flat = jnp.pad(yh_flat, (0, pad))

    rows = (n + pad) // _LANES
    tm = min(_MAX_TM, _round_up(rows, _SUBLANES))
    y2 = y_flat.reshape(rows, _LANES)
    yh2 = yh_flat.reshape(rows, _LANES)

    n_tiles = pl.cdiv(rows, tm)
    nc = min(_NCORES, n_tiles)
    steps = pl.cdiv(n_tiles, nc)
    needs_mask = (rows % tm != 0) or (n_tiles % nc != 0)

    # Clamp so the DMA'd block index always starts inside the array; any
    # duplicated / out-of-range rows are zeroed by the in-kernel mask.
    def in_index(c, i):
        return (jnp.minimum(c * steps + i, n_tiles - 1), 0)

    kernel = _make_kernel(tm, steps, rows, needs_mask)

    itemsize = jnp.dtype(y.dtype).itemsize
    cost = pl.CostEstimate(
        flops=5 * n,
        transcendentals=0,
        bytes_accessed=2 * rows * _LANES * itemsize
        + nc * 2 * _SUBLANES * _LANES * 4,
    )

    partials = pl.pallas_call(
        kernel,
        out_shape=jax.ShapeDtypeStruct((2 * nc, _SUBLANES, _LANES), jnp.float32),
        grid=(nc, steps),
        in_specs=[
            pl.BlockSpec((tm, _LANES), in_index),
            pl.BlockSpec((tm, _LANES), in_index),
        ],
        out_specs=pl.BlockSpec((2, _SUBLANES, _LANES), lambda c, i: (c, 0, 0)),
        compiler_params=pltpu.CompilerParams(
            dimension_semantics=("parallel", "arbitrary"),
        ),
        cost_estimate=cost,
    )(y2, yh2)

    # Tiny final combine on 2*nc*8*128 floats (plain XLA), matching
    # torch.nan_to_num(nan=10.0, posinf=10.0, neginf=-10.0).
    partials = partials.reshape(nc, 2, _SUBLANES, _LANES)
    delta_y = jnp.sum(partials[:, 0])
    scale = jnp.sum(partials[:, 1])
    wmape = delta_y / scale
    return jnp.nan_to_num(wmape, nan=10.0, posinf=10.0, neginf=-10.0)


if __name__ == "__main__":
    key = jax.random.PRNGKey(0)
    k1, k2 = jax.random.split(key)

    # Small NCHW-like tensors: batch=2, channels=4, spatial=16x16
    y = jax.random.normal(k1, (2, 4, 16, 16), dtype=jnp.float32)
    y_hat = jax.random.normal(k2, (2, 4, 16, 16), dtype=jnp.float32)

    wmape = jax.block_until_ready(wmape_loss(y, y_hat))
    ref = jnp.sum(jnp.abs(y - y_hat)) / jnp.sum(jnp.abs(y))
    assert jnp.allclose(wmape, ref, rtol=1e-5, atol=1e-6), (wmape, ref)

    # nan_to_num branch (scale == 0 -> nan -> 10.0)
    zeros = jnp.zeros((2, 4, 16, 16), jnp.float32)
    w0 = jax.block_until_ready(wmape_loss(zeros, zeros))
    assert jnp.allclose(w0, 10.0), w0

    # Ragged size -> exercises the in-kernel tail mask.
    k3, k4 = jax.random.split(k2)
    y_odd = jax.random.normal(k3, (3, 5, 7, 11), dtype=jnp.float32)
    yh_odd = jax.random.normal(k4, (3, 5, 7, 11), dtype=jnp.float32)
    w_odd = jax.block_until_ready(wmape_loss(y_odd, yh_odd))
    ref_odd = jnp.sum(jnp.abs(y_odd - yh_odd)) / jnp.sum(jnp.abs(y_odd))
    assert jnp.allclose(w_odd, ref_odd, rtol=1e-5, atol=1e-6), (w_odd, ref_odd)

    # Larger bf16 input -> exercises multi-tile grid, 2-core split, clamped
    # index_map (n_tiles % ncores != 0) and in-kernel up-cast.
    k5, k6 = jax.random.split(k4)
    y_big = jax.random.normal(k5, (6, 8, 128, 128), dtype=jnp.bfloat16)
    yh_big = jax.random.normal(k6, (6, 8, 128, 128), dtype=jnp.bfloat16)
    w_big = jax.block_until_ready(wmape_loss(y_big, yh_big))
    yb32 = y_big.astype(jnp.float32)
    yhb32 = yh_big.astype(jnp.float32)
    ref_big = jnp.sum(jnp.abs(yb32 - yhb32)) / jnp.sum(jnp.abs(yb32))
    assert jnp.allclose(w_big, ref_big, rtol=1e-3, atol=1e-3), (w_big, ref_big)

    print("KERNEL_OK")
</pallas_src>

<mosaic_0001>
module attributes {stable_mosaic.version = 11 : i64} {
  func.func @kernel(%arg0: i32, %arg1: i32, %arg2: memref<16x128xf32, #tpu.memory_space<vmem>>, %arg3: memref<16x128xf32, #tpu.memory_space<vmem>>, %arg4: memref<2x8x128xf32, #tpu.memory_space<vmem>>) attributes {dimension_semantics = [#tpu.dimension_semantics<parallel>, #tpu.dimension_semantics<arbitrary>], iteration_bounds = array<i64: 1, 1>, scalar_prefetch = 0 : i64, scratch_operands = 0 : i64, tpu.core_type = #tpu.core_type<tc>, window_params = [{transform_indices = @transform_0, window_bounds = array<i64: 16, 128>}, {transform_indices = @transform_1, window_bounds = array<i64: 16, 128>}, {transform_indices = @transform_2, window_bounds = array<i64: 2, 8, 128>}]} {
    %c0_i32 = arith.constant 0 : i32
    %0 = arith.cmpi eq, %arg1, %c0_i32 : i32
    %1 = arith.extui %0 : i1 to i32
    %c0_i32_0 = arith.constant 0 : i32
    %2 = arith.cmpi ne, %1, %c0_i32_0 : i32
    scf.if %2 {
      %cst_16 = arith.constant 0.000000e+00 : f32
      %24 = vector.broadcast %cst_16 : f32 to vector<2x8x128xf32>
      %c0_17 = arith.constant 0 : index
      %c0_18 = arith.constant 0 : index
      %c0_19 = arith.constant 0 : index
      %25 = vector.load %arg4[%c0_17, %c0_18, %c0_19] : memref<2x8x128xf32, #tpu.memory_space<vmem>>, vector<2x8x128xf32>
      tpu.vector_store %arg4[%c0_17, %c0_18, %c0_19], %24 {strides = array<i32>} : memref<2x8x128xf32, #tpu.memory_space<vmem>>, vector<2x8x128xf32>,
    } else {
    }
    %c0 = arith.constant 0 : index
    %c0_1 = arith.constant 0 : index
    %3 = vector.load %arg2[%c0, %c0_1] : memref<16x128xf32, #tpu.memory_space<vmem>>, vector<16x128xf32>
    %c0_2 = arith.constant 0 : index
    %c0_3 = arith.constant 0 : index
    %4 = vector.load %arg3[%c0_2, %c0_3] : memref<16x128xf32, #tpu.memory_space<vmem>>, vector<16x128xf32>
    %5 = arith.subf %3, %4 : vector<16x128xf32>
    %6 = math.absf %5 : vector<16x128xf32>
    %7 = math.absf %3 : vector<16x128xf32>
    %8 = vector.shape_cast %6 : vector<16x128xf32> to vector<2x8x128xf32>
    %9 = vector.shape_cast %7 : vector<16x128xf32> to vector<2x8x128xf32>
    %c0_4 = arith.constant 0 : index
    %c0_5 = arith.constant 0 : index
    %c0_6 = arith.constant 0 : index
    %10 = vector.load %arg4[%c0_4, %c0_5, %c0_6] : memref<2x8x128xf32, #tpu.memory_space<vmem>>, vector<1x8x128xf32>
    %11 = vector.shape_cast %10 : vector<1x8x128xf32> to vector<8x128xf32>
    %cst = arith.constant dense<0.000000e+00> : vector<8x128xf32>
    %12 = vector.multi_reduction <add>, %8, %cst [0] : vector<2x8x128xf32> to vector<8x128xf32>
    %13 = arith.addf %11, %12 : vector<8x128xf32>
    %c0_7 = arith.constant 0 : index
    %c0_8 = arith.constant 0 : index
    %c0_9 = arith.constant 0 : index
    %14 = vector.load %arg4[%c0_7, %c0_8, %c0_9] : memref<2x8x128xf32, #tpu.memory_space<vmem>>, vector<1x8x128xf32>
    %15 = vector.shape_cast %14 : vector<1x8x128xf32> to vector<8x128xf32>
    %16 = vector.shape_cast %13 : vector<8x128xf32> to vector<1x8x128xf32>
    tpu.vector_store %arg4[%c0_7, %c0_8, %c0_9], %16 {strides = array<i32>} : memref<2x8x128xf32, #tpu.memory_space<vmem>>, vector<1x8x128xf32>,
    %c1 = arith.constant 1 : index
    %c0_10 = arith.constant 0 : index
    %c0_11 = arith.constant 0 : index
    %17 = vector.load %arg4[%c1, %c0_10, %c0_11] : memref<2x8x128xf32, #tpu.memory_space<vmem>>, vector<1x8x128xf32>
    %18 = vector.shape_cast %17 : vector<1x8x128xf32> to vector<8x128xf32>
    %cst_12 = arith.constant dense<0.000000e+00> : vector<8x128xf32>
    %19 = vector.multi_reduction <add>, %9, %cst_12 [0] : vector<2x8x128xf32> to vector<8x128xf32>
    %20 = arith.addf %18, %19 : vector<8x128xf32>
    %c1_13 = arith.constant 1 : index
    %c0_14 = arith.constant 0 : index
    %c0_15 = arith.constant 0 : index
    %21 = vector.load %arg4[%c1_13, %c0_14, %c0_15] : memref<2x8x128xf32, #tpu.memory_space<vmem>>, vector<1x8x128xf32>
    %22 = vector.shape_cast %21 : vector<1x8x128xf32> to vector<8x128xf32>
    %23 = vector.shape_cast %20 : vector<8x128xf32> to vector<1x8x128xf32>
    tpu.vector_store %arg4[%c1_13, %c0_14, %c0_15], %23 {strides = array<i32>} : memref<2x8x128xf32, #tpu.memory_space<vmem>>, vector<1x8x128xf32>,
    return
  }
  func.func @transform_0(%arg0: i32, %arg1: i32) -> (i32, i32) {
    %c1_i32 = arith.constant 1 : i32
    %0 = arith.muli %arg0, %c1_i32 : i32
    %1 = arith.addi %0, %arg1 : i32
    %c0_i32 = arith.constant 0 : i32
    %2 = arith.minsi %1, %c0_i32 : i32
    %c0_i32_0 = arith.constant 0 : i32
    %c0_i32_1 = arith.constant 0 : i32
    return %2, %c0_i32_0 : i32, i32
  }
  func.func @transform_1(%arg0: i32, %arg1: i32) -> (i32, i32) {
    %c1_i32 = arith.constant 1 : i32
    %0 = arith.muli %arg0, %c1_i32 : i32
    %1 = arith.addi %0, %arg1 : i32
    %c0_i32 = arith.constant 0 : i32
    %2 = arith.minsi %1, %c0_i32 : i32
    %c0_i32_0 = arith.constant 0 : i32
    %c0_i32_1 = arith.constant 0 : i32
    return %2, %c0_i32_0 : i32, i32
  }
  func.func @transform_2(%arg0: i32, %arg1: i32) -> (i32, i32, i32) {
    %c0_i32 = arith.constant 0 : i32
    %c0_i32_0 = arith.constant 0 : i32
    %c0_i32_1 = arith.constant 0 : i32
    return %arg0, %c0_i32, %c0_i32_0 : i32, i32, i32
  }
}

</mosaic_0001>

<llo_original>
// kernel: tpu_custom_call.1
$region0: #{tpu_custom_call.1}
  #allocation0 [shape = 'u32[]', space=smem, size = 0x4, offset = 0x4, fixed_abs, tag = 'smem constant byte address 0x4 - core index']
  #allocation1 [shape = 'u32[72,128]{1,0:T(1,128)}', space=vmem, size = 0x9000, scoped, tag = 'internal scratch']
  %s0 = inlined_call_operand.hbm [shape: f32[16,128], index: 0, kind: input, shape index: {}]
  %s1 = inlined_call_operand.hbm [shape: f32[16,128], index: 1, kind: input, shape index: {}]
  %s2 = inlined_call_operand.hbm [shape: f32[2,8,128], index: 2, kind: output, shape index: {}]
  %s3 = sld [smem:[#allocation0]]
  $region30: #{tpu_custom_call.1} parent=0
    _
  %s5 = ssub.s32 1, %s3
  %s6 = scalar_select 0, %s5, %s3
  $region1: #{tpu_custom_call.1} parent=0
    #allocation2 [shape = 'u8[8192]{0}', space=vmem, size = 0x2000, scoped, tag = 'input window, operand 0, single buffered']
    #allocation3 [shape = 's32[1]{0}', space=sflag, size = 0x4, scoped, tag = 'scoped memory for tpu_custom_call.1']
    #allocation4 [shape = 's32[1]{0}', space=sflag, size = 0x4, scoped, tag = 'scoped memory for tpu_custom_call.1']
    #allocation5 [shape = 'u8[8192]{0}', space=vmem, size = 0x2000, scoped, tag = 'input window, operand 1, single buffered']
    #allocation6 [shape = 's32[1]{0}', space=sflag, size = 0x4, scoped, tag = 'scoped memory for tpu_custom_call.1']
    #allocation7 [shape = 'u8[8192]{0}', space=vmem, size = 0x2000, scoped, tag = 'output window, operand 0, single buffered']
    %7 = vsyncpa [#allocation3], 0
    %8 = vsyncpa [#allocation6], 0
    %9 = vsyncpa [#allocation4], 0
    // Predicated region
    $region2: #{tpu_custom_call.1} parent=1 // pred_check
      _
    $region3: #{tpu_custom_call.1} parent=1 // pred_check_branch
      %11 = sbr.rel (0) target = $region5
    $region4: #{tpu_custom_call.1} parent=1 // pred_region
      %s12 = sadd.s32 0, 0
      %p13 = scmp.lt.s32.totalorder %s12, 0
      %s14 = scalar_select %p13, %s12, 0
      %s15 = smul.u32 2, %s14
      %17 = vsyncadd [#allocation3], 0
      %s18 = smul.addr %s15, 8
      %s19 = scalar_lea.hbm %s0, %s18
      %s20 = sshll.u32 %s19, 4
      %s21 = int_to_ptr.hbm [resolvable:$true] %s20
      %s22 = sshll.u32 [#allocation2], 4
      %s23 = int_to_ptr.vmem [resolvable:$true] %s22
      %28 = dma.hbm_to_vmem [thread:$0]  %s21, 256, %s23, [#allocation3], 128, 128, 8
    $region5: #{tpu_custom_call.1} parent=1 // pred_fallthru
      _
    // Predicated region
    $region6: #{tpu_custom_call.1} parent=1 // pred_check
      _
    $region7: #{tpu_custom_call.1} parent=1 // pred_check_branch
      %30 = sbr.rel (0) target = $region9
    $region8: #{tpu_custom_call.1} parent=1 // pred_region
      %s31 = sadd.s32 0, 0
      %p32 = scmp.lt.s32.totalorder %s31, 0
      %s33 = scalar_select %p32, %s31, 0
      %s34 = smul.u32 2, %s33
      %36 = vsyncadd [#allocation6], 0
      %s37 = smul.addr %s34, 8
      %s38 = scalar_lea.hbm %s1, %s37
      %s39 = sshll.u32 %s38, 4
      %s40 = int_to_ptr.hbm [resolvable:$true] %s39
      %s41 = sshll.u32 [#allocation5], 4
      %s42 = int_to_ptr.vmem [resolvable:$true] %s41
      %47 = dma.hbm_to_vmem [thread:$0]  %s40, 256, %s42, [#allocation6], 128, 128, 8
    $region9: #{tpu_custom_call.1} parent=1 // pred_fallthru
      _
    // Predicated region
    $region10: #{tpu_custom_call.1} parent=1 // pred_check
      _
    $region11: #{tpu_custom_call.1} parent=1 // pred_check_branch
      %49 = sbr.rel (0) target = $region13
    $region12: #{tpu_custom_call.1} parent=1 // pred_region
      %51 = dma.done [#allocation3], 256
    $region13: #{tpu_custom_call.1} parent=1 // pred_fallthru
      _
    // Predicated region
    $region14: #{tpu_custom_call.1} parent=1 // pred_check
      _
    $region15: #{tpu_custom_call.1} parent=1 // pred_check_branch
      %53 = sbr.rel (0) target = $region17
    $region16: #{tpu_custom_call.1} parent=1 // pred_region
      %55 = dma.done [#allocation6], 256
    $region17: #{tpu_custom_call.1} parent=1 // pred_fallthru
      _
    %s56 = sadd.s32 0, 0
    %p57 = scmp.lt.s32.totalorder %s56, 0
    %s58 = scalar_select %p57, %s56, 0
    %s59 = smul.u32 2, %s58
    %s60 = sadd.s32 0, 0
    %p61 = scmp.lt.s32.totalorder %s60, 0
    %s62 = scalar_select %p61, %s60, 0
    %s63 = smul.u32 2, %s62
    %p64 = scmp.eq.s32.totalorder 0, 0
    // Predicated region
    $region18: #{tpu_custom_call.1} parent=1 // pred_check
      %p65 = pneg %p64
    $region19: #{tpu_custom_call.1} parent=1 // pred_check_branch
      %67 = sbr.rel (%p65) target = $region21
    $region20: #{tpu_custom_call.1} parent=1 // pred_region
      %68 = vst [vmem:[#allocation7] sm:$0xff] 0.0
      %69 = vst [vmem:[#allocation7 + $0x8] sm:$0xff] 0.0
    $region21: #{tpu_custom_call.1} parent=1 // pred_fallthru
      _
    %v70 = vld [vmem:[#allocation2] sm:$0xff]
    %v71 = vld [vmem:[#allocation2 + $0x8] sm:$0xff]
    %v72 = vld [vmem:[#allocation5] sm:$0xff]
    %v73 = vld [vmem:[#allocation5 + $0x8] sm:$0xff]
    %v74 = vsub.f32 %v70, %v72
    %v75 = vsub.f32 %v71, %v73
    %v76 = vand.u32 2147483647, %v74
    %v77 = vand.u32 2147483647, %v75
    %v78 = vand.u32 2147483647, %v70
    %v79 = vand.u32 2147483647, %v71
    %v80 = vld [vmem:[#allocation7] sm:$0xff]
    %v81 = vadd.f32 %v76, %v77
    %v82 = vadd.f32 %v80, %v81
    %83 = vst [vmem:[#allocation7] sm:$0xff] %v82
    %s84 = scalar_lea.vmem [#allocation7], 8
    %v85 = vld [vmem:[%s84] sm:$0xff]
    %v86 = vadd.f32 %v78, %v79
    %v87 = vadd.f32 %v85, %v86
    %88 = vst [vmem:[%s84] sm:$0xff] %v87
    // Predicated region
    $region22: #{tpu_custom_call.1} parent=1 // pred_check
      _
    $region23: #{tpu_custom_call.1} parent=1 // pred_check_branch
      %90 = sbr.rel (0) target = $region25
    $region24: #{tpu_custom_call.1} parent=1 // pred_region
      %92 = vsyncadd [#allocation4], 0
      %s93 = sshll.u32 [#allocation7], 4
      %s94 = int_to_ptr.vmem [resolvable:$true] %s93
      %s95 = sshll.u32 %s2, 4
      %s96 = int_to_ptr.hbm [resolvable:$true] %s95
      %101 = dma.vmem_to_hbm [thread:$0]  %s94, 256, %s96, [#allocation4], 128, 128, 8
    $region25: #{tpu_custom_call.1} parent=1 // pred_fallthru
      _
    // Predicated region
    $region26: #{tpu_custom_call.1} parent=1 // pred_check
      _
    $region27: #{tpu_custom_call.1} parent=1 // pred_check_branch
      %103 = sbr.rel (0) target = $region29
    $region28: #{tpu_custom_call.1} parent=1 // pred_region
      %105 = dma.done [#allocation4], 256
    $region29: #{tpu_custom_call.1} parent=1 // pred_fallthru
      _
    %106 = vsyncpa [#allocation3], 1
    %107 = vsyncpa [#allocation6], 1
    %108 = vsyncpa [#allocation4], 1

</llo_original>
